<compile_context>
chip_gen: v5e
topology: v5e:2x2
jax: 0.10.0
libtpu: 0.0.40
codegen_flags: <defaults>
</compile_context>

<pallas_src>
import functools

import jax
import jax.numpy as jnp
from jax.experimental import pallas as pl
from jax.experimental.pallas import tpu as pltpu


def _round_up(x, m):
    return ((x + m - 1) // m) * m


def _vmem_budget_bytes():
    """Generation-aware scoped-VMEM budget with a conservative fallback."""
    try:
        cap = int(pltpu.get_tpu_info().vmem_capacity_bytes)
    except Exception:  # query unavailable -> assume the smallest (v7x: 64 MiB/TC)
        cap = 64 << 20
    return int(cap * 0.85)  # leave headroom for compiler scratch


def _linear_kernel(x_ref, w_ref, b_ref, o_ref):
    """One (tm, n_pad) output tile: in-kernel cast, full-K MXU dot, bias add."""
    x = x_ref[...].astype(w_ref.dtype)  # VPU cast, hidden under the DMA bound
    acc = jnp.dot(x, w_ref[...], preferred_element_type=jnp.float32)
    o_ref[...] = (acc + b_ref[...]).astype(o_ref.dtype)


def prepare_linear_classifier_params(weight, bias, *, compute_dtype=jnp.bfloat16,
                                     pad_bias_value=-1e9):
    """One-time per-head prep: W.T, cast, pad classes to a multiple of 128.

    Padded bias columns get `pad_bias_value` so a padded (unsliced) output is
    still argmax/softmax safe.
    """
    num_classes, out_dim = weight.shape
    n_pad = _round_up(max(num_classes, 128), 128)
    w_t = jnp.zeros((out_dim, n_pad), compute_dtype).at[:, :num_classes].set(
        weight.T.astype(compute_dtype))
    b_row = jnp.full((1, n_pad), pad_bias_value, jnp.float32).at[:, :num_classes].set(
        bias.astype(jnp.float32))
    return w_t, b_row


@functools.partial(
    jax.jit,
    static_argnames=("num_classes", "tm", "out_dtype", "single_buffer_weights"))
def _linear_apply_2d(x, w_t, b_row, *, num_classes, tm=512,
                     out_dtype=jnp.bfloat16, single_buffer_weights=None):
    """y = x @ W.T + b for 2-D f32 x using prepared (w_t, b_row)."""
    M, K = x.shape
    K2, n_pad = w_t.shape
    assert K == K2, (K, K2)
    assert num_classes <= n_pad

    w_bytes = jnp.dtype(w_t.dtype).itemsize
    x_bytes = jnp.dtype(x.dtype).itemsize
    out_bytes = jnp.dtype(out_dtype).itemsize

    # Single-buffer the VMEM-resident weight when double-buffering it would be
    # expensive (large K on v7x's 64 MiB/TC VMEM); its index_map is constant so
    # one buffer is sufficient.
    w_resident = K * n_pad * w_bytes
    if single_buffer_weights is None:
        single_buffer_weights = hasattr(pl, "Buffered") and w_resident > (8 << 20)
    single_buffer_weights = bool(single_buffer_weights) and hasattr(pl, "Buffered")
    w_bufs = 1 if single_buffer_weights else 2

    # Row tile: 16-aligned (bf16 output packing).  Ensure >=2 grid blocks so
    # the "parallel" M axis can split across v7x's two TensorCores; shrink the
    # tile further if the VMEM footprint exceeds this generation's budget.
    tm_eff = min(tm, _round_up(M, 16))
    if pl.cdiv(M, tm_eff) < 2 and M > 16:
        tm_eff = _round_up(pl.cdiv(M, 2), 16)

    budget = _vmem_budget_bytes()

    def footprint(tm_e):
        return (w_bufs * w_resident
                + 2 * 8 * n_pad * 4                  # bias row (sublane-padded)
                + 2 * tm_e * K * x_bytes             # x tiles (double-buffered)
                + 2 * tm_e * n_pad * out_bytes)      # output tiles

    while footprint(tm_eff) > budget and tm_eff > 64:
        tm_eff = max(64, tm_eff // 2)

    grid = (pl.cdiv(M, tm_eff),)
    vmem_limit = int(min(max(int(footprint(tm_eff) * 1.25) + (4 << 20), 16 << 20),
                         budget))

    w_spec_kwargs = {}
    if single_buffer_weights:
        w_spec_kwargs["pipeline_mode"] = pl.Buffered(1)
    w_spec = pl.BlockSpec((K, n_pad), lambda i: (0, 0), **w_spec_kwargs)

    cost = pl.CostEstimate(
        flops=2 * M * K * n_pad,
        transcendentals=0,
        bytes_accessed=(M * K * x_bytes + K * n_pad * w_bytes
                        + n_pad * 4 + M * n_pad * out_bytes))

    out = pl.pallas_call(
        _linear_kernel,
        out_shape=jax.ShapeDtypeStruct((M, n_pad), out_dtype),
        grid_spec=pltpu.PrefetchScalarGridSpec(
            num_scalar_prefetch=0,
            grid=grid,
            in_specs=[
                pl.BlockSpec((tm_eff, K), lambda i: (i, 0)),   # x rows, streamed
                w_spec,                                        # weight, resident
                pl.BlockSpec((1, n_pad), lambda i: (0, 0)),    # bias, resident
            ],
            out_specs=pl.BlockSpec((tm_eff, n_pad), lambda i: (i, 0)),
        ),
        compiler_params=pltpu.CompilerParams(
            dimension_semantics=("parallel",),
            vmem_limit_bytes=vmem_limit,
        ),
        cost_estimate=cost,
    )(x, w_t, b_row)

    if n_pad != num_classes:
        out = out[:, :num_classes]  # fuses into consumers under jit
    return out


def linear_classifier_apply(x, w_t, b_row, *, num_classes, tm=512,
                            out_dtype=jnp.bfloat16, single_buffer_weights=None):
    """Forward with prepared params; x may have arbitrary leading dims."""
    lead = x.shape[:-1]
    x2 = x.reshape(-1, x.shape[-1])
    y2 = _linear_apply_2d(x2, w_t, b_row, num_classes=num_classes, tm=tm,
                          out_dtype=out_dtype,
                          single_buffer_weights=single_buffer_weights)
    return y2.reshape(*lead, num_classes)


def linear_classifier_forward(x, weight, bias, *, tm=512,
                              out_dtype=jnp.bfloat16,
                              compute_dtype=jnp.bfloat16):
    """Convenience one-shot API matching LinearClassifier.forward.

    For repeated calls, hoist prepare_linear_classifier_params() and reuse
    linear_classifier_apply() so the weight transpose/cast runs once per head.
    """
    w_t, b_row = prepare_linear_classifier_params(weight, bias,
                                                  compute_dtype=compute_dtype)
    return linear_classifier_apply(x, w_t, b_row, num_classes=weight.shape[0],
                                   tm=tm, out_dtype=out_dtype)


def init_linear_classifier_params(key, out_dim, num_classes):
    """Matches the PyTorch module init: weight ~ N(0, 0.01), bias = 0."""
    w = 0.01 * jax.random.normal(key, (num_classes, out_dim), dtype=jnp.float32)
    b = jnp.zeros((num_classes,), dtype=jnp.float32)
    return w, b


if __name__ == "__main__":
    # Small shapes consistent with the forward pass; num_classes=1000 (module
    # default) exercises the 1000 -> 1024 lane padding path.
    batch = 16
    out_dim = 256
    num_classes = 1000

    key = jax.random.PRNGKey(0)
    k_x, k_w, k_b, k_t = jax.random.split(key, 4)

    x = jax.random.normal(k_x, (batch, out_dim), dtype=jnp.float32)
    weight = 0.01 * jax.random.normal(k_w, (num_classes, out_dim),
                                      dtype=jnp.float32)
    # Nonzero bias to exercise the bias epilogue (the module init zeroes it;
    # see init_linear_classifier_params for the faithful initializer).
    bias = 0.1 * jax.random.normal(k_b, (num_classes,), dtype=jnp.float32)

    # Per-head prep hoisted out of the forward (runs once), then kernel-only
    # forwards that reuse it.
    w_t, b_row = prepare_linear_classifier_params(weight, bias)
    y = linear_classifier_apply(x, w_t, b_row, num_classes=num_classes)
    y = jax.block_until_ready(y)

    assert y.shape == (batch, num_classes)
    assert y.dtype == jnp.bfloat16
    y32 = y.astype(jnp.float32)

    # Reference (a): same bf16-operand / f32-accumulate path (only the bf16
    # output rounding differs).
    y_ref_bf16 = (jnp.dot(x.astype(jnp.bfloat16), weight.T.astype(jnp.bfloat16),
                          preferred_element_type=jnp.float32) + bias)
    # Reference (b): full f32, loose tolerance (bf16 operand/output quantization).
    y_ref_f32 = x @ weight.T + bias
    assert jnp.allclose(y32, y_ref_bf16, atol=1e-2, rtol=1e-2)
    assert jnp.allclose(y32, y_ref_f32, atol=3e-2, rtol=3e-2)

    # Second call reusing the prepared params: leading token dims and a ragged
    # row count (no M-padding copy; Pallas masks the partial last block).
    x_tok = jax.random.normal(k_t, (3, 5, out_dim), dtype=jnp.float32)
    y_tok = linear_classifier_apply(x_tok, w_t, b_row, num_classes=num_classes)
    y_tok = jax.block_until_ready(y_tok)
    assert y_tok.shape == (3, 5, num_classes)
    y_tok_ref = jnp.einsum("bsd,nd->bsn", x_tok, weight) + bias
    assert jnp.allclose(y_tok.astype(jnp.float32), y_tok_ref, atol=3e-2, rtol=3e-2)

    print("KERNEL_OK")
</pallas_src>

<mosaic_0001>
module attributes {stable_mosaic.version = 11 : i64} {
  func.func @_linear_kernel(%arg0: i32, %arg1: memref<16x256xf32, #tpu.memory_space<vmem>>, %arg2: memref<256x1024xbf16, #tpu.memory_space<vmem>>, %arg3: memref<1x1024xf32, #tpu.memory_space<vmem>>, %arg4: memref<16x1024xbf16, #tpu.memory_space<vmem>>) attributes {dimension_semantics = [#tpu.dimension_semantics<parallel>], iteration_bounds = array<i64: 1>, scalar_prefetch = 0 : i64, scratch_operands = 0 : i64, tpu.core_type = #tpu.core_type<tc>, window_params = [{transform_indices = @transform_0, window_bounds = array<i64: 16, 256>}, {pipeline_mode = #tpu.pipeline_mode<synchronous>, transform_indices = @transform_1, window_bounds = array<i64: 256, 1024>}, {pipeline_mode = #tpu.pipeline_mode<synchronous>, transform_indices = @transform_2, window_bounds = array<i64: 1, 1024>}, {transform_indices = @transform_3, window_bounds = array<i64: 16, 1024>}]} {
    %c0 = arith.constant 0 : index
    %c0_0 = arith.constant 0 : index
    %0 = vector.load %arg1[%c0, %c0_0] : memref<16x256xf32, #tpu.memory_space<vmem>>, vector<16x256xf32>
    %1 = arith.truncf %0 : vector<16x256xf32> to vector<16x256xbf16>
    %c0_1 = arith.constant 0 : index
    %c0_2 = arith.constant 0 : index
    %2 = vector.load %arg2[%c0_1, %c0_2] : memref<256x1024xbf16, #tpu.memory_space<vmem>>, vector<256x1024xbf16>
    %cst = arith.constant dense<0.000000e+00> : vector<16x1024xf32>
    %3 = tpu.matmul %1, %2, %cst {dimension_numbers = #tpu.dot_dimension_numbers<[1], [0], [0], [1], [0, 0, 1, 1], [], []>} : vector<16x256xbf16>, vector<256x1024xbf16>, vector<16x1024xf32> -> vector<16x1024xf32>
    %c0_3 = arith.constant 0 : index
    %c0_4 = arith.constant 0 : index
    %4 = vector.load %arg3[%c0_3, %c0_4] : memref<1x1024xf32, #tpu.memory_space<vmem>>, vector<1x1024xf32>
    %5 = vector.broadcast %4 : vector<1x1024xf32> to vector<16x1024xf32>
    %6 = arith.addf %3, %5 : vector<16x1024xf32>
    %7 = arith.truncf %6 : vector<16x1024xf32> to vector<16x1024xbf16>
    %c0_5 = arith.constant 0 : index
    %c0_6 = arith.constant 0 : index
    %8 = vector.load %arg4[%c0_5, %c0_6] : memref<16x1024xbf16, #tpu.memory_space<vmem>>, vector<16x1024xbf16>
    tpu.vector_store %arg4[%c0_5, %c0_6], %7 {strides = array<i32>} : memref<16x1024xbf16, #tpu.memory_space<vmem>>, vector<16x1024xbf16>,
    return
  }
  func.func @transform_0(%arg0: i32) -> (i32, i32) {
    %c0_i32 = arith.constant 0 : i32
    %c0_i32_0 = arith.constant 0 : i32
    return %arg0, %c0_i32 : i32, i32
  }
  func.func @transform_1(%arg0: i32) -> (i32, i32) {
    %c0_i32 = arith.constant 0 : i32
    %c0_i32_0 = arith.constant 0 : i32
    %c0_i32_1 = arith.constant 0 : i32
    return %c0_i32, %c0_i32_0 : i32, i32
  }
  func.func @transform_2(%arg0: i32) -> (i32, i32) {
    %c0_i32 = arith.constant 0 : i32
    %c0_i32_0 = arith.constant 0 : i32
    %c0_i32_1 = arith.constant 0 : i32
    return %c0_i32, %c0_i32_0 : i32, i32
  }
  func.func @transform_3(%arg0: i32) -> (i32, i32) {
    %c0_i32 = arith.constant 0 : i32
    %c0_i32_0 = arith.constant 0 : i32
    return %arg0, %c0_i32 : i32, i32
  }
}

</mosaic_0001>

<llo_original>
// kernel: _linear_apply_2d.1
$region0: #{_linear_apply_2d.1}
  #allocation0 [shape = 'u32[]', space=smem, size = 0x4, offset = 0x4, fixed_abs, tag = 'smem constant byte address 0x4 - core index']
  #allocation1 [shape = 'u32[72,128]{1,0:T(1,128)}', space=vmem, size = 0x9000, scoped, tag = 'internal scratch']
  %s0 = inlined_call_operand.hbm [shape: f32[16,256], index: 0, kind: input, shape index: {}]
  %s1 = inlined_call_operand.hbm [shape: bf16[256,1024], index: 1, kind: input, shape index: {}]
  %s2 = inlined_call_operand.hbm [shape: f32[1,1024], index: 2, kind: input, shape index: {}]
  %s3 = inlined_call_operand.hbm [shape: bf16[16,1024], index: 3, kind: output, shape index: {}]
  %s4 = sld [smem:[#allocation0]]
  $region34: #{_linear_apply_2d.1} parent=0
    _
  %s6 = ssub.s32 1, %s4
  %s7 = scalar_select 0, %s6, %s4
  $region1: #{_linear_apply_2d.1} parent=0
    #allocation2 [shape = 'u8[16384]{0}', space=vmem, size = 0x4000, scoped, tag = 'input window, operand 0, single buffered']
    #allocation3 [shape = 's32[1]{0}', space=sflag, size = 0x4, scoped, tag = 'scoped memory for _linear_apply_2d.1']
    #allocation4 [shape = 's32[1]{0}', space=sflag, size = 0x4, scoped, tag = 'scoped memory for _linear_apply_2d.1']
    #allocation5 [shape = 'u8[524288]{0}', space=vmem, size = 0x80000, scoped, tag = 'input window, operand 1, single buffered']
    #allocation6 [shape = 's32[1]{0}', space=sflag, size = 0x4, scoped, tag = 'scoped memory for _linear_apply_2d.1']
    #allocation7 [shape = 'u8[4096]{0}', space=vmem, size = 0x1000, scoped, tag = 'input window, operand 2, single buffered']
    #allocation8 [shape = 'u8[32768]{0}', space=vmem, size = 0x8000, scoped, tag = 'output window, operand 0, single buffered']
    %8 = vsyncpa [#allocation3], 0
    %9 = vsyncpa [#allocation6], 0
    %10 = vsyncpa [#allocation4], 0
    // Predicated region
    $region2: #{_linear_apply_2d.1} parent=1 // pred_check
      _
    $region3: #{_linear_apply_2d.1} parent=1 // pred_check_branch
      %12 = sbr.rel (0) target = $region5
    $region4: #{_linear_apply_2d.1} parent=1 // pred_region
      %14 = vsyncadd [#allocation3], 0
      %s15 = sshll.u32 %s0, 4
      %s16 = int_to_ptr.hbm [resolvable:$true] %s15
      %s17 = sshll.u32 [#allocation2], 4
      %s18 = int_to_ptr.vmem [resolvable:$true] %s17
      %23 = dma.hbm_to_vmem [thread:$0]  %s16, 512, %s18, [#allocation3], 256, 256, 16
    $region5: #{_linear_apply_2d.1} parent=1 // pred_fallthru
      _
    // Predicated region
    $region6: #{_linear_apply_2d.1} parent=1 // pred_check
      _
    $region7: #{_linear_apply_2d.1} parent=1 // pred_check_branch
      %25 = sbr.rel (0) target = $region9
    $region8: #{_linear_apply_2d.1} parent=1 // pred_region
      %27 = vsyncadd [#allocation6], 0
      %s28 = sshll.u32 %s1, 4
      %s29 = int_to_ptr.hbm [resolvable:$true] %s28
      %s30 = sshll.u32 [#allocation5], 4
      %s31 = int_to_ptr.vmem [resolvable:$true] %s30
      %36 = dma.hbm_to_vmem [thread:$0]  %s29, 16384, %s31, [#allocation6], 512, 512, 32
    $region9: #{_linear_apply_2d.1} parent=1 // pred_fallthru
      _
    // Predicated region
    $region10: #{_linear_apply_2d.1} parent=1 // pred_check
      _
    $region11: #{_linear_apply_2d.1} parent=1 // pred_check_branch
      %38 = sbr.rel (0) target = $region13
    $region12: #{_linear_apply_2d.1} parent=1 // pred_region
      %40 = vsyncadd [#allocation6], 0
      %s42 = sshll.u32 %s2, 4
      %s43 = int_to_ptr.hbm [resolvable:$true] %s42
      %s44 = sshll.u32 [#allocation7], 4
      %s45 = int_to_ptr.vmem [resolvable:$true] %s44
      %47 = dma.hbm_to_vmem [thread:$0]  %s43, 128, %s45, [#allocation6]
    $region13: #{_linear_apply_2d.1} parent=1 // pred_fallthru
      _
    // Predicated region
    $region14: #{_linear_apply_2d.1} parent=1 // pred_check
      _
    $region15: #{_linear_apply_2d.1} parent=1 // pred_check_branch
      %49 = sbr.rel (0) target = $region17
    $region16: #{_linear_apply_2d.1} parent=1 // pred_region
      %51 = dma.done [#allocation3], 512
    $region17: #{_linear_apply_2d.1} parent=1 // pred_fallthru
      _
    // Predicated region
    $region18: #{_linear_apply_2d.1} parent=1 // pred_check
      _
    $region19: #{_linear_apply_2d.1} parent=1 // pred_check_branch
      %53 = sbr.rel (0) target = $region21
    $region20: #{_linear_apply_2d.1} parent=1 // pred_region
      %55 = dma.done [#allocation6], 16384
    $region21: #{_linear_apply_2d.1} parent=1 // pred_fallthru
      _
    // Predicated region
    $region22: #{_linear_apply_2d.1} parent=1 // pred_check
      _
    $region23: #{_linear_apply_2d.1} parent=1 // pred_check_branch
      %57 = sbr.rel (0) target = $region25
    $region24: #{_linear_apply_2d.1} parent=1 // pred_region
      %59 = dma.done [#allocation6], 128
    $region25: #{_linear_apply_2d.1} parent=1 // pred_fallthru
      _
    %v60 = vld [vmem:[#allocation2] sm:$0xff]
    %v61 = vld [vmem:[#allocation2 + $0x8] sm:$0xff]
    %v62 = vld [vmem:[#allocation2 + $0x10] sm:$0xff]
    %v63 = vld [vmem:[#allocation2 + $0x18] sm:$0xff]
    %v64 = vpack.c.bf16 %v62, %v60
    %v65 = vpack.c.bf16 %v63, %v61
    %v66 = vld [vmem:[#allocation5] sm:$0xff]
    %v67 = vld [vmem:[#allocation5 + $0x8] sm:$0xff]
    %v68 = vld [vmem:[#allocation5 + $0x10] sm:$0xff]
    %v69 = vld [vmem:[#allocation5 + $0x18] sm:$0xff]
    %v70 = vld [vmem:[#allocation5 + $0x20] sm:$0xff]
    %v71 = vld [vmem:[#allocation5 + $0x28] sm:$0xff]
    %v72 = vld [vmem:[#allocation5 + $0x30] sm:$0xff]
    %v73 = vld [vmem:[#allocation5 + $0x38] sm:$0xff]
    %v74 = vld [vmem:[#allocation5 + $0x40] sm:$0xff]
    %v75 = vld [vmem:[#allocation5 + $0x48] sm:$0xff]
    %v76 = vld [vmem:[#allocation5 + $0x50] sm:$0xff]
    %v77 = vld [vmem:[#allocation5 + $0x58] sm:$0xff]
    %v78 = vld [vmem:[#allocation5 + $0x60] sm:$0xff]
    %v79 = vld [vmem:[#allocation5 + $0x68] sm:$0xff]
    %v80 = vld [vmem:[#allocation5 + $0x70] sm:$0xff]
    %v81 = vld [vmem:[#allocation5 + $0x78] sm:$0xff]
    %v82 = vld [vmem:[#allocation5 + $0x80] sm:$0xff]
    %v83 = vld [vmem:[#allocation5 + $0x88] sm:$0xff]
    %v84 = vld [vmem:[#allocation5 + $0x90] sm:$0xff]
    %v85 = vld [vmem:[#allocation5 + $0x98] sm:$0xff]
    %v86 = vld [vmem:[#allocation5 + $0xa0] sm:$0xff]
    %v87 = vld [vmem:[#allocation5 + $0xa8] sm:$0xff]
    %v88 = vld [vmem:[#allocation5 + $0xb0] sm:$0xff]
    %v89 = vld [vmem:[#allocation5 + $0xb8] sm:$0xff]
    %v90 = vld [vmem:[#allocation5 + $0xc0] sm:$0xff]
    %v91 = vld [vmem:[#allocation5 + $0xc8] sm:$0xff]
    %v92 = vld [vmem:[#allocation5 + $0xd0] sm:$0xff]
    %v93 = vld [vmem:[#allocation5 + $0xd8] sm:$0xff]
    %v94 = vld [vmem:[#allocation5 + $0xe0] sm:$0xff]
    %v95 = vld [vmem:[#allocation5 + $0xe8] sm:$0xff]
    %v96 = vld [vmem:[#allocation5 + $0xf0] sm:$0xff]
    %v97 = vld [vmem:[#allocation5 + $0xf8] sm:$0xff]
    %v98 = vld [vmem:[#allocation5 + $0x100] sm:$0xff]
    %v99 = vld [vmem:[#allocation5 + $0x108] sm:$0xff]
    %v100 = vld [vmem:[#allocation5 + $0x110] sm:$0xff]
    %v101 = vld [vmem:[#allocation5 + $0x118] sm:$0xff]
    %v102 = vld [vmem:[#allocation5 + $0x120] sm:$0xff]
    %v103 = vld [vmem:[#allocation5 + $0x128] sm:$0xff]
    %v104 = vld [vmem:[#allocation5 + $0x130] sm:$0xff]
    %v105 = vld [vmem:[#allocation5 + $0x138] sm:$0xff]
    %v106 = vld [vmem:[#allocation5 + $0x140] sm:$0xff]
    %v107 = vld [vmem:[#allocation5 + $0x148] sm:$0xff]
    %v108 = vld [vmem:[#allocation5 + $0x150] sm:$0xff]
    %v109 = vld [vmem:[#allocation5 + $0x158] sm:$0xff]
    %v110 = vld [vmem:[#allocation5 + $0x160] sm:$0xff]
    %v111 = vld [vmem:[#allocation5 + $0x168] sm:$0xff]
    %v112 = vld [vmem:[#allocation5 + $0x170] sm:$0xff]
    %v113 = vld [vmem:[#allocation5 + $0x178] sm:$0xff]
    %v114 = vld [vmem:[#allocation5 + $0x180] sm:$0xff]
    %v115 = vld [vmem:[#allocation5 + $0x188] sm:$0xff]
    %v116 = vld [vmem:[#allocation5 + $0x190] sm:$0xff]
    %v117 = vld [vmem:[#allocation5 + $0x198] sm:$0xff]
    %v118 = vld [vmem:[#allocation5 + $0x1a0] sm:$0xff]
    %v119 = vld [vmem:[#allocation5 + $0x1a8] sm:$0xff]
    %v120 = vld [vmem:[#allocation5 + $0x1b0] sm:$0xff]
    %v121 = vld [vmem:[#allocation5 + $0x1b8] sm:$0xff]
    %v122 = vld [vmem:[#allocation5 + $0x1c0] sm:$0xff]
    %v123 = vld [vmem:[#allocation5 + $0x1c8] sm:$0xff]
    %v124 = vld [vmem:[#allocation5 + $0x1d0] sm:$0xff]
    %v125 = vld [vmem:[#allocation5 + $0x1d8] sm:$0xff]
    %v126 = vld [vmem:[#allocation5 + $0x1e0] sm:$0xff]
    %v127 = vld [vmem:[#allocation5 + $0x1e8] sm:$0xff]
    %v128 = vld [vmem:[#allocation5 + $0x1f0] sm:$0xff]
    %v129 = vld [vmem:[#allocation5 + $0x1f8] sm:$0xff]
    %v130 = vld [vmem:[#allocation5 + $0x200] sm:$0xff]
    %v131 = vld [vmem:[#allocation5 + $0x208] sm:$0xff]
    %v132 = vld [vmem:[#allocation5 + $0x210] sm:$0xff]
    %v133 = vld [vmem:[#allocation5 + $0x218] sm:$0xff]
    %v134 = vld [vmem:[#allocation5 + $0x220] sm:$0xff]
    %v135 = vld [vmem:[#allocation5 + $0x228] sm:$0xff]
    %v136 = vld [vmem:[#allocation5 + $0x230] sm:$0xff]
    %v137 = vld [vmem:[#allocation5 + $0x238] sm:$0xff]
    %v138 = vld [vmem:[#allocation5 + $0x240] sm:$0xff]
    %v139 = vld [vmem:[#allocation5 + $0x248] sm:$0xff]
    %v140 = vld [vmem:[#allocation5 + $0x250] sm:$0xff]
    %v141 = vld [vmem:[#allocation5 + $0x258] sm:$0xff]
    %v142 = vld [vmem:[#allocation5 + $0x260] sm:$0xff]
    %v143 = vld [vmem:[#allocation5 + $0x268] sm:$0xff]
    %v144 = vld [vmem:[#allocation5 + $0x270] sm:$0xff]
    %v145 = vld [vmem:[#allocation5 + $0x278] sm:$0xff]
    %v146 = vld [vmem:[#allocation5 + $0x280] sm:$0xff]
    %v147 = vld [vmem:[#allocation5 + $0x288] sm:$0xff]
    %v148 = vld [vmem:[#allocation5 + $0x290] sm:$0xff]
    %v149 = vld [vmem:[#allocation5 + $0x298] sm:$0xff]
    %v150 = vld [vmem:[#allocation5 + $0x2a0] sm:$0xff]
    %v151 = vld [vmem:[#allocation5 + $0x2a8] sm:$0xff]
    %v152 = vld [vmem:[#allocation5 + $0x2b0] sm:$0xff]
    %v153 = vld [vmem:[#allocation5 + $0x2b8] sm:$0xff]
    %v154 = vld [vmem:[#allocation5 + $0x2c0] sm:$0xff]
    %v155 = vld [vmem:[#allocation5 + $0x2c8] sm:$0xff]
    %v156 = vld [vmem:[#allocation5 + $0x2d0] sm:$0xff]
    %v157 = vld [vmem:[#allocation5 + $0x2d8] sm:$0xff]
    %v158 = vld [vmem:[#allocation5 + $0x2e0] sm:$0xff]
    %v159 = vld [vmem:[#allocation5 + $0x2e8] sm:$0xff]
    %v160 = vld [vmem:[#allocation5 + $0x2f0] sm:$0xff]
    %v161 = vld [vmem:[#allocation5 + $0x2f8] sm:$0xff]
    %v162 = vld [vmem:[#allocation5 + $0x300] sm:$0xff]
    %v163 = vld [vmem:[#allocation5 + $0x308] sm:$0xff]
    %v164 = vld [vmem:[#allocation5 + $0x310] sm:$0xff]
    %v165 = vld [vmem:[#allocation5 + $0x318] sm:$0xff]
    %v166 = vld [vmem:[#allocation5 + $0x320] sm:$0xff]
    %v167 = vld [vmem:[#allocation5 + $0x328] sm:$0xff]
    %v168 = vld [vmem:[#allocation5 + $0x330] sm:$0xff]
    %v169 = vld [vmem:[#allocation5 + $0x338] sm:$0xff]
    %v170 = vld [vmem:[#allocation5 + $0x340] sm:$0xff]
    %v171 = vld [vmem:[#allocation5 + $0x348] sm:$0xff]
    %v172 = vld [vmem:[#allocation5 + $0x350] sm:$0xff]
    %v173 = vld [vmem:[#allocation5 + $0x358] sm:$0xff]
    %v174 = vld [vmem:[#allocation5 + $0x360] sm:$0xff]
    %v175 = vld [vmem:[#allocation5 + $0x368] sm:$0xff]
    %v176 = vld [vmem:[#allocation5 + $0x370] sm:$0xff]
    %v177 = vld [vmem:[#allocation5 + $0x378] sm:$0xff]
    %v178 = vld [vmem:[#allocation5 + $0x380] sm:$0xff]
    %v179 = vld [vmem:[#allocation5 + $0x388] sm:$0xff]
    %v180 = vld [vmem:[#allocation5 + $0x390] sm:$0xff]
    %v181 = vld [vmem:[#allocation5 + $0x398] sm:$0xff]
    %v182 = vld [vmem:[#allocation5 + $0x3a0] sm:$0xff]
    %v183 = vld [vmem:[#allocation5 + $0x3a8] sm:$0xff]
    %v184 = vld [vmem:[#allocation5 + $0x3b0] sm:$0xff]
    %v185 = vld [vmem:[#allocation5 + $0x3b8] sm:$0xff]
    %v186 = vld [vmem:[#allocation5 + $0x3c0] sm:$0xff]
    %v187 = vld [vmem:[#allocation5 + $0x3c8] sm:$0xff]
    %v188 = vld [vmem:[#allocation5 + $0x3d0] sm:$0xff]
    %v189 = vld [vmem:[#allocation5 + $0x3d8] sm:$0xff]
    %v190 = vld [vmem:[#allocation5 + $0x3e0] sm:$0xff]
    %v191 = vld [vmem:[#allocation5 + $0x3e8] sm:$0xff]
    %v192 = vld [vmem:[#allocation5 + $0x3f0] sm:$0xff]
    %v193 = vld [vmem:[#allocation5 + $0x3f8] sm:$0xff]
    %v194 = vld [vmem:[#allocation7] sm:$0xff]
    %v196 = vperm.slane %v194, 0
    %v197 = vperm.slane %v194, 1
    %v198 = vperm.slane %v194, 2
    %v199 = vperm.slane %v194, 3
    %v200 = vperm.slane %v194, 4
    %v201 = vperm.slane %v194, 5
    %v202 = vperm.slane %v194, 6
    %v203 = vperm.slane %v194, 7
    %v340 = vunpack.c.l.b16 %v66
    %v341 = vunpack.c.h.b16 %v66
    %v342 = vunpack.c.l.b16 %v67
    %v343 = vunpack.c.h.b16 %v67
    %v344 = vunpack.c.l.b16 %v68
    %v345 = vunpack.c.h.b16 %v68
    %v346 = vunpack.c.l.b16 %v69
    %v347 = vunpack.c.h.b16 %v69
    %v348 = vunpack.c.l.b16 %v70
    %v349 = vunpack.c.h.b16 %v70
    %v350 = vunpack.c.l.b16 %v71
    %v351 = vunpack.c.h.b16 %v71
    %v352 = vunpack.c.l.b16 %v72
    %v353 = vunpack.c.h.b16 %v72
    %v354 = vunpack.c.l.b16 %v73
    %v355 = vunpack.c.h.b16 %v73
    %v356 = vunpack.c.l.b16 %v74
    %v357 = vunpack.c.h.b16 %v74
    %v358 = vunpack.c.l.b16 %v75
    %v359 = vunpack.c.h.b16 %v75
    %v360 = vunpack.c.l.b16 %v76
    %v361 = vunpack.c.h.b16 %v76
    %v362 = vunpack.c.l.b16 %v77
    %v363 = vunpack.c.h.b16 %v77
    %v364 = vunpack.c.l.b16 %v78
    %v365 = vunpack.c.h.b16 %v78
    %v366 = vunpack.c.l.b16 %v79
    %v367 = vunpack.c.h.b16 %v79
    %v368 = vunpack.c.l.b16 %v80
    %v369 = vunpack.c.h.b16 %v80
    %v370 = vunpack.c.l.b16 %v81
    %v371 = vunpack.c.h.b16 %v81
    %v372 = vunpack.c.l.b16 %v82
    %v373 = vunpack.c.h.b16 %v82
    %v374 = vunpack.c.l.b16 %v83
    %v375 = vunpack.c.h.b16 %v83
    %v376 = vunpack.c.l.b16 %v84
    %v377 = vunpack.c.h.b16 %v84
    %v378 = vunpack.c.l.b16 %v85
    %v379 = vunpack.c.h.b16 %v85
    %v380 = vunpack.c.l.b16 %v86
    %v381 = vunpack.c.h.b16 %v86
    %v382 = vunpack.c.l.b16 %v87
    %v383 = vunpack.c.h.b16 %v87
    %v384 = vunpack.c.l.b16 %v88
    %v385 = vunpack.c.h.b16 %v88
    %v386 = vunpack.c.l.b16 %v89
    %v387 = vunpack.c.h.b16 %v89
    %v388 = vunpack.c.l.b16 %v90
    %v389 = vunpack.c.h.b16 %v90
    %v390 = vunpack.c.l.b16 %v91
    %v391 = vunpack.c.h.b16 %v91
    %v392 = vunpack.c.l.b16 %v92
    %v393 = vunpack.c.h.b16 %v92
    %v394 = vunpack.c.l.b16 %v93
    %v395 = vunpack.c.h.b16 %v93
    %v396 = vunpack.c.l.b16 %v94
    %v397 = vunpack.c.h.b16 %v94
    %v398 = vunpack.c.l.b16 %v95
    %v399 = vunpack.c.h.b16 %v95
    %v400 = vunpack.c.l.b16 %v96
    %v401 = vunpack.c.h.b16 %v96
    %v402 = vunpack.c.l.b16 %v97
    %v403 = vunpack.c.h.b16 %v97
    %v404 = vunpack.c.l.b16 %v98
    %v405 = vunpack.c.h.b16 %v98
    %v406 = vunpack.c.l.b16 %v99
    %v407 = vunpack.c.h.b16 %v99
    %v408 = vunpack.c.l.b16 %v100
    %v409 = vunpack.c.h.b16 %v100
    %v410 = vunpack.c.l.b16 %v101
    %v411 = vunpack.c.h.b16 %v101
    %v412 = vunpack.c.l.b16 %v102
    %v413 = vunpack.c.h.b16 %v102
    %v414 = vunpack.c.l.b16 %v103
    %v415 = vunpack.c.h.b16 %v103
    %v416 = vunpack.c.l.b16 %v104
    %v417 = vunpack.c.h.b16 %v104
    %v418 = vunpack.c.l.b16 %v105
    %v419 = vunpack.c.h.b16 %v105
    %v420 = vunpack.c.l.b16 %v106
    %v421 = vunpack.c.h.b16 %v106
    %v422 = vunpack.c.l.b16 %v107
    %v423 = vunpack.c.h.b16 %v107
    %v424 = vunpack.c.l.b16 %v108
    %v425 = vunpack.c.h.b16 %v108
    %v426 = vunpack.c.l.b16 %v109
    %v427 = vunpack.c.h.b16 %v109
    %v428 = vunpack.c.l.b16 %v110
    %v429 = vunpack.c.h.b16 %v110
    %v430 = vunpack.c.l.b16 %v111
    %v431 = vunpack.c.h.b16 %v111
    %v432 = vunpack.c.l.b16 %v112
    %v433 = vunpack.c.h.b16 %v112
    %v434 = vunpack.c.l.b16 %v113
    %v435 = vunpack.c.h.b16 %v113
    %v436 = vunpack.c.l.b16 %v114
    %v437 = vunpack.c.h.b16 %v114
    %v438 = vunpack.c.l.b16 %v115
    %v439 = vunpack.c.h.b16 %v115
    %v440 = vunpack.c.l.b16 %v116
    %v441 = vunpack.c.h.b16 %v116
    %v442 = vunpack.c.l.b16 %v117
    %v443 = vunpack.c.h.b16 %v117
    %v444 = vunpack.c.l.b16 %v118
    %v445 = vunpack.c.h.b16 %v118
    %v446 = vunpack.c.l.b16 %v119
    %v447 = vunpack.c.h.b16 %v119
    %v448 = vunpack.c.l.b16 %v120
    %v449 = vunpack.c.h.b16 %v120
    %v450 = vunpack.c.l.b16 %v121
    %v451 = vunpack.c.h.b16 %v121
    %v452 = vunpack.c.l.b16 %v122
    %v453 = vunpack.c.h.b16 %v122
    %v454 = vunpack.c.l.b16 %v123
    %v455 = vunpack.c.h.b16 %v123
    %v456 = vunpack.c.l.b16 %v124
    %v457 = vunpack.c.h.b16 %v124
    %v458 = vunpack.c.l.b16 %v125
    %v459 = vunpack.c.h.b16 %v125
    %v460 = vunpack.c.l.b16 %v126
    %v461 = vunpack.c.h.b16 %v126
    %v462 = vunpack.c.l.b16 %v127
    %v463 = vunpack.c.h.b16 %v127
    %v464 = vunpack.c.l.b16 %v128
    %v465 = vunpack.c.h.b16 %v128
    %v466 = vunpack.c.l.b16 %v129
    %v467 = vunpack.c.h.b16 %v129
    %v468 = vunpack.c.l.b16 %v130
    %v469 = vunpack.c.h.b16 %v130
    %v470 = vunpack.c.l.b16 %v131
    %v471 = vunpack.c.h.b16 %v131
    %v472 = vunpack.c.l.b16 %v132
    %v473 = vunpack.c.h.b16 %v132
    %v474 = vunpack.c.l.b16 %v133
    %v475 = vunpack.c.h.b16 %v133
    %v476 = vunpack.c.l.b16 %v134
    %v477 = vunpack.c.h.b16 %v134
    %v478 = vunpack.c.l.b16 %v135
    %v479 = vunpack.c.h.b16 %v135
    %v480 = vunpack.c.l.b16 %v136
    %v481 = vunpack.c.h.b16 %v136
    %v482 = vunpack.c.l.b16 %v137
    %v483 = vunpack.c.h.b16 %v137
    %v484 = vunpack.c.l.b16 %v138
    %v485 = vunpack.c.h.b16 %v138
    %v486 = vunpack.c.l.b16 %v139
    %v487 = vunpack.c.h.b16 %v139
    %v488 = vunpack.c.l.b16 %v140
    %v489 = vunpack.c.h.b16 %v140
    %v490 = vunpack.c.l.b16 %v141
    %v491 = vunpack.c.h.b16 %v141
    %v492 = vunpack.c.l.b16 %v142
    %v493 = vunpack.c.h.b16 %v142
    %v494 = vunpack.c.l.b16 %v143
    %v495 = vunpack.c.h.b16 %v143
    %v496 = vunpack.c.l.b16 %v144
    %v497 = vunpack.c.h.b16 %v144
    %v498 = vunpack.c.l.b16 %v145
    %v499 = vunpack.c.h.b16 %v145
    %v500 = vunpack.c.l.b16 %v146
    %v501 = vunpack.c.h.b16 %v146
    %v502 = vunpack.c.l.b16 %v147
    %v503 = vunpack.c.h.b16 %v147
    %v504 = vunpack.c.l.b16 %v148
    %v505 = vunpack.c.h.b16 %v148
    %v506 = vunpack.c.l.b16 %v149
    %v507 = vunpack.c.h.b16 %v149
    %v508 = vunpack.c.l.b16 %v150
    %v509 = vunpack.c.h.b16 %v150
    %v510 = vunpack.c.l.b16 %v151
    %v511 = vunpack.c.h.b16 %v151
    %v512 = vunpack.c.l.b16 %v152
    %v513 = vunpack.c.h.b16 %v152
    %v514 = vunpack.c.l.b16 %v153
    %v515 = vunpack.c.h.b16 %v153
    %v516 = vunpack.c.l.b16 %v154
    %v517 = vunpack.c.h.b16 %v154
    %v518 = vunpack.c.l.b16 %v155
    %v519 = vunpack.c.h.b16 %v155
    %v520 = vunpack.c.l.b16 %v156
    %v521 = vunpack.c.h.b16 %v156
    %v522 = vunpack.c.l.b16 %v157
    %v523 = vunpack.c.h.b16 %v157
    %v524 = vunpack.c.l.b16 %v158
    %v525 = vunpack.c.h.b16 %v158
    %v526 = vunpack.c.l.b16 %v159
    %v527 = vunpack.c.h.b16 %v159
    %v528 = vunpack.c.l.b16 %v160
    %v529 = vunpack.c.h.b16 %v160
    %v530 = vunpack.c.l.b16 %v161
    %v531 = vunpack.c.h.b16 %v161
    %v532 = vunpack.c.l.b16 %v162
    %v533 = vunpack.c.h.b16 %v162
    %v534 = vunpack.c.l.b16 %v163
    %v535 = vunpack.c.h.b16 %v163
    %v536 = vunpack.c.l.b16 %v164
    %v537 = vunpack.c.h.b16 %v164
    %v538 = vunpack.c.l.b16 %v165
    %v539 = vunpack.c.h.b16 %v165
    %v540 = vunpack.c.l.b16 %v166
    %v541 = vunpack.c.h.b16 %v166
    %v542 = vunpack.c.l.b16 %v167
    %v543 = vunpack.c.h.b16 %v167
    %v544 = vunpack.c.l.b16 %v168
    %v545 = vunpack.c.h.b16 %v168
    %v546 = vunpack.c.l.b16 %v169
    %v547 = vunpack.c.h.b16 %v169
    %v548 = vunpack.c.l.b16 %v170
    %v549 = vunpack.c.h.b16 %v170
    %v550 = vunpack.c.l.b16 %v171
    %v551 = vunpack.c.h.b16 %v171
    %v552 = vunpack.c.l.b16 %v172
    %v553 = vunpack.c.h.b16 %v172
    %v554 = vunpack.c.l.b16 %v173
    %v555 = vunpack.c.h.b16 %v173
    %v556 = vunpack.c.l.b16 %v174
    %v557 = vunpack.c.h.b16 %v174
    %v558 = vunpack.c.l.b16 %v175
    %v559 = vunpack.c.h.b16 %v175
    %v560 = vunpack.c.l.b16 %v176
    %v561 = vunpack.c.h.b16 %v176
    %v562 = vunpack.c.l.b16 %v177
    %v563 = vunpack.c.h.b16 %v177
    %v564 = vunpack.c.l.b16 %v178
    %v565 = vunpack.c.h.b16 %v178
    %v566 = vunpack.c.l.b16 %v179
    %v567 = vunpack.c.h.b16 %v179
    %v568 = vunpack.c.l.b16 %v180
    %v569 = vunpack.c.h.b16 %v180
    %v570 = vunpack.c.l.b16 %v181
    %v571 = vunpack.c.h.b16 %v181
    %v572 = vunpack.c.l.b16 %v182
    %v573 = vunpack.c.h.b16 %v182
    %v574 = vunpack.c.l.b16 %v183
    %v575 = vunpack.c.h.b16 %v183
    %v576 = vunpack.c.l.b16 %v184
    %v577 = vunpack.c.h.b16 %v184
    %v578 = vunpack.c.l.b16 %v185
    %v579 = vunpack.c.h.b16 %v185
    %v580 = vunpack.c.l.b16 %v186
    %v581 = vunpack.c.h.b16 %v186
    %v582 = vunpack.c.l.b16 %v187
    %v583 = vunpack.c.h.b16 %v187
    %v584 = vunpack.c.l.b16 %v188
    %v585 = vunpack.c.h.b16 %v188
    %v586 = vunpack.c.l.b16 %v189
    %v587 = vunpack.c.h.b16 %v189
    %v588 = vunpack.c.l.b16 %v190
    %v589 = vunpack.c.h.b16 %v190
    %v590 = vunpack.c.l.b16 %v191
    %v591 = vunpack.c.h.b16 %v191
    %v592 = vunpack.c.l.b16 %v192
    %v593 = vunpack.c.h.b16 %v192
    %v594 = vunpack.c.l.b16 %v193
    %v595 = vunpack.c.h.b16 %v193
    %v596 = vpack.c.b16 %v348, %v340
    %v597 = vpack.c.b16 %v349, %v341
    %v598 = vpack.c.b16 %v350, %v342
    %v599 = vpack.c.b16 %v351, %v343
    %v600 = vpack.c.b16 %v352, %v344
    %v601 = vpack.c.b16 %v353, %v345
    %v602 = vpack.c.b16 %v354, %v346
    %v603 = vpack.c.b16 %v355, %v347
    %v604 = vpack.c.b16 %v364, %v356
    %v605 = vpack.c.b16 %v365, %v357
    %v606 = vpack.c.b16 %v366, %v358
    %v607 = vpack.c.b16 %v367, %v359
    %v608 = vpack.c.b16 %v368, %v360
    %v609 = vpack.c.b16 %v369, %v361
    %v610 = vpack.c.b16 %v370, %v362
    %v611 = vpack.c.b16 %v371, %v363
    %v612 = vpack.c.b16 %v380, %v372
    %v613 = vpack.c.b16 %v381, %v373
    %v614 = vpack.c.b16 %v382, %v374
    %v615 = vpack.c.b16 %v383, %v375
    %v616 = vpack.c.b16 %v384, %v376
    %v617 = vpack.c.b16 %v385, %v377
    %v618 = vpack.c.b16 %v386, %v378
    %v619 = vpack.c.b16 %v387, %v379
    %v620 = vpack.c.b16 %v396, %v388
    %v621 = vpack.c.b16 %v397, %v389
    %v622 = vpack.c.b16 %v398, %v390
    %v623 = vpack.c.b16 %v399, %v391
    %v624 = vpack.c.b16 %v400, %v392
    %v625 = vpack.c.b16 %v401, %v393
    %v626 = vpack.c.b16 %v402, %v394
    %v627 = vpack.c.b16 %v403, %v395
    %v628 = vpack.c.b16 %v412, %v404
    %v629 = vpack.c.b16 %v413, %v405
    %v630 = vpack.c.b16 %v414, %v406
    %v631 = vpack.c.b16 %v415, %v407
    %v632 = vpack.c.b16 %v416, %v408
    %v633 = vpack.c.b16 %v417, %v409
    %v634 = vpack.c.b16 %v418, %v410
    %v635 = vpack.c.b16 %v419, %v411
    %v636 = vpack.c.b16 %v428, %v420
    %v637 = vpack.c.b16 %v429, %v421
    %v638 = vpack.c.b16 %v430, %v422
    %v639 = vpack.c.b16 %v431, %v423
    %v640 = vpack.c.b16 %v432, %v424
    %v641 = vpack.c.b16 %v433, %v425
    %v642 = vpack.c.b16 %v434, %v426
    %v643 = vpack.c.b16 %v435, %v427
    %v644 = vpack.c.b16 %v444, %v436
    %v645 = vpack.c.b16 %v445, %v437
    %v646 = vpack.c.b16 %v446, %v438
    %v647 = vpack.c.b16 %v447, %v439
    %v648 = vpack.c.b16 %v448, %v440
    %v649 = vpack.c.b16 %v449, %v441
    %v650 = vpack.c.b16 %v450, %v442
    %v651 = vpack.c.b16 %v451, %v443
    %v652 = vpack.c.b16 %v460, %v452
    %v653 = vpack.c.b16 %v461, %v453
    %v654 = vpack.c.b16 %v462, %v454
    %v655 = vpack.c.b16 %v463, %v455
    %v656 = vpack.c.b16 %v464, %v456
    %v657 = vpack.c.b16 %v465, %v457
    %v658 = vpack.c.b16 %v466, %v458
    %v659 = vpack.c.b16 %v467, %v459
    %v660 = vpack.c.b16 %v476, %v468
    %v661 = vpack.c.b16 %v477, %v469
    %v662 = vpack.c.b16 %v478, %v470
    %v663 = vpack.c.b16 %v479, %v471
    %v664 = vpack.c.b16 %v480, %v472
    %v665 = vpack.c.b16 %v481, %v473
    %v666 = vpack.c.b16 %v482, %v474
    %v667 = vpack.c.b16 %v483, %v475
    %v668 = vpack.c.b16 %v492, %v484
    %v669 = vpack.c.b16 %v493, %v485
    %v670 = vpack.c.b16 %v494, %v486
    %v671 = vpack.c.b16 %v495, %v487
    %v672 = vpack.c.b16 %v496, %v488
    %v673 = vpack.c.b16 %v497, %v489
    %v674 = vpack.c.b16 %v498, %v490
    %v675 = vpack.c.b16 %v499, %v491
    %v676 = vpack.c.b16 %v508, %v500
    %v677 = vpack.c.b16 %v509, %v501
    %v678 = vpack.c.b16 %v510, %v502
    %v679 = vpack.c.b16 %v511, %v503
    %v680 = vpack.c.b16 %v512, %v504
    %v681 = vpack.c.b16 %v513, %v505
    %v682 = vpack.c.b16 %v514, %v506
    %v683 = vpack.c.b16 %v515, %v507
    %v684 = vpack.c.b16 %v524, %v516
    %v685 = vpack.c.b16 %v525, %v517
    %v686 = vpack.c.b16 %v526, %v518
    %v687 = vpack.c.b16 %v527, %v519
    %v688 = vpack.c.b16 %v528, %v520
    %v689 = vpack.c.b16 %v529, %v521
    %v690 = vpack.c.b16 %v530, %v522
    %v691 = vpack.c.b16 %v531, %v523
    %v692 = vpack.c.b16 %v540, %v532
    %v693 = vpack.c.b16 %v541, %v533
    %v694 = vpack.c.b16 %v542, %v534
    %v695 = vpack.c.b16 %v543, %v535
    %v696 = vpack.c.b16 %v544, %v536
    %v697 = vpack.c.b16 %v545, %v537
    %v698 = vpack.c.b16 %v546, %v538
    %v699 = vpack.c.b16 %v547, %v539
    %v700 = vpack.c.b16 %v556, %v548
    %v701 = vpack.c.b16 %v557, %v549
    %v702 = vpack.c.b16 %v558, %v550
    %v703 = vpack.c.b16 %v559, %v551
    %v704 = vpack.c.b16 %v560, %v552
    %v705 = vpack.c.b16 %v561, %v553
    %v706 = vpack.c.b16 %v562, %v554
    %v707 = vpack.c.b16 %v563, %v555
    %v708 = vpack.c.b16 %v572, %v564
    %v709 = vpack.c.b16 %v573, %v565
    %v710 = vpack.c.b16 %v574, %v566
    %v711 = vpack.c.b16 %v575, %v567
    %v712 = vpack.c.b16 %v576, %v568
    %v713 = vpack.c.b16 %v577, %v569
    %v714 = vpack.c.b16 %v578, %v570
    %v715 = vpack.c.b16 %v579, %v571
    %v716 = vpack.c.b16 %v588, %v580
    %v717 = vpack.c.b16 %v589, %v581
    %v718 = vpack.c.b16 %v590, %v582
    %v719 = vpack.c.b16 %v591, %v583
    %v720 = vpack.c.b16 %v592, %v584
    %v721 = vpack.c.b16 %v593, %v585
    %v722 = vpack.c.b16 %v594, %v586
    %v723 = vpack.c.b16 %v595, %v587
    %852 = vmatpush.bf16.msra.mxu0 %v652
    %853 = vmatpush.bf16.msra.mxu0 %v644
    %854 = vmatpush.bf16.msra.mxu0 %v636
    %855 = vmatpush.bf16.msra.mxu0 %v628
    %856 = vmatpush.bf16.msra.mxu0 %v620
    %857 = vmatpush.bf16.msra.mxu0 %v612
    %858 = vmatpush.bf16.msra.mxu0 %v604
    %859 = vmatpush.bf16.msra.mxu0 %v596
    %860 = vmatmul.bf16.gmra.mxu0 %v64
    %v861 = vpop.f32.mrf.mxu0
    %v862 = vadd.f32 %v196, %v861
    %v863 = vpop.f32.mrf.mxu0
    %v864 = vadd.f32 %v196, %v863
    %865 = vdwg.mxu0
    %866 = vmatpush.bf16.msra.mxu0 %v716
    %867 = vmatpush.bf16.msra.mxu0 %v708
    %868 = vmatpush.bf16.msra.mxu0 %v700
    %869 = vmatpush.bf16.msra.mxu0 %v692
    %870 = vmatpush.bf16.msra.mxu0 %v684
    %871 = vmatpush.bf16.msra.mxu0 %v676
    %872 = vmatpush.bf16.msra.mxu0 %v668
    %873 = vmatpush.bf16.msra.mxu0 %v660
    %874 = vmatmul.bf16.gmra.mxu0 %v65
    %v875 = vpop.f32.mrf.mxu0
    %v876 = vadd.f32 %v862, %v875
    %v877 = vpop.f32.mrf.mxu0
    %v878 = vadd.f32 %v864, %v877
    %879 = vdwg.mxu0
    %880 = vmatpush.bf16.msra.mxu0 %v653
    %881 = vmatpush.bf16.msra.mxu0 %v645
    %882 = vmatpush.bf16.msra.mxu0 %v637
    %883 = vmatpush.bf16.msra.mxu0 %v629
    %884 = vmatpush.bf16.msra.mxu0 %v621
    %885 = vmatpush.bf16.msra.mxu0 %v613
    %886 = vmatpush.bf16.msra.mxu0 %v605
    %887 = vmatpush.bf16.msra.mxu0 %v597
    %888 = vmatmul.bf16.gmra.mxu0 %v64
    %v889 = vpop.f32.mrf.mxu0
    %v890 = vadd.f32 %v197, %v889
    %v891 = vpop.f32.mrf.mxu0
    %v892 = vadd.f32 %v197, %v891
    %893 = vdwg.mxu0
    %894 = vmatpush.bf16.msra.mxu0 %v717
    %895 = vmatpush.bf16.msra.mxu0 %v709
    %896 = vmatpush.bf16.msra.mxu0 %v701
    %897 = vmatpush.bf16.msra.mxu0 %v693
    %898 = vmatpush.bf16.msra.mxu0 %v685
    %899 = vmatpush.bf16.msra.mxu0 %v677
    %900 = vmatpush.bf16.msra.mxu0 %v669
    %901 = vmatpush.bf16.msra.mxu0 %v661
    %902 = vmatmul.bf16.gmra.mxu0 %v65
    %v903 = vpop.f32.mrf.mxu0
    %v904 = vadd.f32 %v890, %v903
    %v905 = vpop.f32.mrf.mxu0
    %v906 = vadd.f32 %v892, %v905
    %907 = vdwg.mxu0
    %908 = vmatpush.bf16.msra.mxu0 %v654
    %909 = vmatpush.bf16.msra.mxu0 %v646
    %910 = vmatpush.bf16.msra.mxu0 %v638
    %911 = vmatpush.bf16.msra.mxu0 %v630
    %912 = vmatpush.bf16.msra.mxu0 %v622
    %913 = vmatpush.bf16.msra.mxu0 %v614
    %914 = vmatpush.bf16.msra.mxu0 %v606
    %915 = vmatpush.bf16.msra.mxu0 %v598
    %916 = vmatmul.bf16.gmra.mxu0 %v64
    %v917 = vpop.f32.mrf.mxu0
    %v918 = vadd.f32 %v198, %v917
    %v919 = vpop.f32.mrf.mxu0
    %v920 = vadd.f32 %v198, %v919
    %921 = vdwg.mxu0
    %922 = vmatpush.bf16.msra.mxu0 %v718
    %923 = vmatpush.bf16.msra.mxu0 %v710
    %924 = vmatpush.bf16.msra.mxu0 %v702
    %925 = vmatpush.bf16.msra.mxu0 %v694
    %926 = vmatpush.bf16.msra.mxu0 %v686
    %927 = vmatpush.bf16.msra.mxu0 %v678
    %928 = vmatpush.bf16.msra.mxu0 %v670
    %929 = vmatpush.bf16.msra.mxu0 %v662
    %930 = vmatmul.bf16.gmra.mxu0 %v65
    %v931 = vpop.f32.mrf.mxu0
    %v932 = vadd.f32 %v918, %v931
    %v933 = vpop.f32.mrf.mxu0
    %v934 = vadd.f32 %v920, %v933
    %935 = vdwg.mxu0
    %936 = vmatpush.bf16.msra.mxu0 %v655
    %937 = vmatpush.bf16.msra.mxu0 %v647
    %938 = vmatpush.bf16.msra.mxu0 %v639
    %939 = vmatpush.bf16.msra.mxu0 %v631
    %940 = vmatpush.bf16.msra.mxu0 %v623
    %941 = vmatpush.bf16.msra.mxu0 %v615
    %942 = vmatpush.bf16.msra.mxu0 %v607
    %943 = vmatpush.bf16.msra.mxu0 %v599
    %944 = vmatmul.bf16.gmra.mxu0 %v64
    %v945 = vpop.f32.mrf.mxu0
    %v946 = vadd.f32 %v199, %v945
    %v947 = vpop.f32.mrf.mxu0
    %v948 = vadd.f32 %v199, %v947
    %949 = vdwg.mxu0
    %950 = vmatpush.bf16.msra.mxu0 %v719
    %951 = vmatpush.bf16.msra.mxu0 %v711
    %952 = vmatpush.bf16.msra.mxu0 %v703
    %953 = vmatpush.bf16.msra.mxu0 %v695
    %954 = vmatpush.bf16.msra.mxu0 %v687
    %955 = vmatpush.bf16.msra.mxu0 %v679
    %956 = vmatpush.bf16.msra.mxu0 %v671
    %957 = vmatpush.bf16.msra.mxu0 %v663
    %958 = vmatmul.bf16.gmra.mxu0 %v65
    %v959 = vpop.f32.mrf.mxu0
    %v960 = vadd.f32 %v946, %v959
    %v961 = vpop.f32.mrf.mxu0
    %v962 = vadd.f32 %v948, %v961
    %963 = vdwg.mxu0
    %964 = vmatpush.bf16.msra.mxu0 %v656
    %965 = vmatpush.bf16.msra.mxu0 %v648
    %966 = vmatpush.bf16.msra.mxu0 %v640
    %967 = vmatpush.bf16.msra.mxu0 %v632
    %968 = vmatpush.bf16.msra.mxu0 %v624
    %969 = vmatpush.bf16.msra.mxu0 %v616
    %970 = vmatpush.bf16.msra.mxu0 %v608
    %971 = vmatpush.bf16.msra.mxu0 %v600
    %972 = vmatmul.bf16.gmra.mxu0 %v64
    %v973 = vpop.f32.mrf.mxu0
    %v974 = vadd.f32 %v200, %v973
    %v975 = vpop.f32.mrf.mxu0
    %v976 = vadd.f32 %v200, %v975
    %977 = vdwg.mxu0
    %978 = vmatpush.bf16.msra.mxu0 %v720
    %979 = vmatpush.bf16.msra.mxu0 %v712
    %980 = vmatpush.bf16.msra.mxu0 %v704
    %981 = vmatpush.bf16.msra.mxu0 %v696
    %982 = vmatpush.bf16.msra.mxu0 %v688
    %983 = vmatpush.bf16.msra.mxu0 %v680
    %984 = vmatpush.bf16.msra.mxu0 %v672
    %985 = vmatpush.bf16.msra.mxu0 %v664
    %986 = vmatmul.bf16.gmra.mxu0 %v65
    %v987 = vpop.f32.mrf.mxu0
    %v988 = vadd.f32 %v974, %v987
    %v989 = vpop.f32.mrf.mxu0
    %v990 = vadd.f32 %v976, %v989
    %991 = vdwg.mxu0
    %992 = vmatpush.bf16.msra.mxu0 %v657
    %993 = vmatpush.bf16.msra.mxu0 %v649
    %994 = vmatpush.bf16.msra.mxu0 %v641
    %995 = vmatpush.bf16.msra.mxu0 %v633
    %996 = vmatpush.bf16.msra.mxu0 %v625
    %997 = vmatpush.bf16.msra.mxu0 %v617
    %998 = vmatpush.bf16.msra.mxu0 %v609
    %999 = vmatpush.bf16.msra.mxu0 %v601
    %1000 = vmatmul.bf16.gmra.mxu0 %v64
    %v1001 = vpop.f32.mrf.mxu0
    %v1002 = vadd.f32 %v201, %v1001
    %v1003 = vpop.f32.mrf.mxu0
    %v1004 = vadd.f32 %v201, %v1003
    %1005 = vdwg.mxu0
    %1006 = vmatpush.bf16.msra.mxu0 %v721
    %1007 = vmatpush.bf16.msra.mxu0 %v713
    %1008 = vmatpush.bf16.msra.mxu0 %v705
    %1009 = vmatpush.bf16.msra.mxu0 %v697
    %1010 = vmatpush.bf16.msra.mxu0 %v689
    %1011 = vmatpush.bf16.msra.mxu0 %v681
    %1012 = vmatpush.bf16.msra.mxu0 %v673
    %1013 = vmatpush.bf16.msra.mxu0 %v665
    %1014 = vmatmul.bf16.gmra.mxu0 %v65
    %v1015 = vpop.f32.mrf.mxu0
    %v1016 = vadd.f32 %v1002, %v1015
    %v1017 = vpop.f32.mrf.mxu0
    %v1018 = vadd.f32 %v1004, %v1017
    %1019 = vdwg.mxu0
    %1020 = vmatpush.bf16.msra.mxu0 %v658
    %1021 = vmatpush.bf16.msra.mxu0 %v650
    %1022 = vmatpush.bf16.msra.mxu0 %v642
    %1023 = vmatpush.bf16.msra.mxu0 %v634
    %1024 = vmatpush.bf16.msra.mxu0 %v626
    %1025 = vmatpush.bf16.msra.mxu0 %v618
    %1026 = vmatpush.bf16.msra.mxu0 %v610
    %1027 = vmatpush.bf16.msra.mxu0 %v602
    %1028 = vmatmul.bf16.gmra.mxu0 %v64
    %v1029 = vpop.f32.mrf.mxu0
    %v1030 = vadd.f32 %v202, %v1029
    %v1031 = vpop.f32.mrf.mxu0
    %v1032 = vadd.f32 %v202, %v1031
    %1033 = vdwg.mxu0
    %1034 = vmatpush.bf16.msra.mxu0 %v722
    %1035 = vmatpush.bf16.msra.mxu0 %v714
    %1036 = vmatpush.bf16.msra.mxu0 %v706
    %1037 = vmatpush.bf16.msra.mxu0 %v698
    %1038 = vmatpush.bf16.msra.mxu0 %v690
    %1039 = vmatpush.bf16.msra.mxu0 %v682
    %1040 = vmatpush.bf16.msra.mxu0 %v674
    %1041 = vmatpush.bf16.msra.mxu0 %v666
    %1042 = vmatmul.bf16.gmra.mxu0 %v65
    %v1043 = vpop.f32.mrf.mxu0
    %v1044 = vadd.f32 %v1030, %v1043
    %v1045 = vpop.f32.mrf.mxu0
    %v1046 = vadd.f32 %v1032, %v1045
    %1047 = vdwg.mxu0
    %1048 = vmatpush.bf16.msra.mxu0 %v659
    %1049 = vmatpush.bf16.msra.mxu0 %v651
    %1050 = vmatpush.bf16.msra.mxu0 %v643
    %1051 = vmatpush.bf16.msra.mxu0 %v635
    %1052 = vmatpush.bf16.msra.mxu0 %v627
    %1053 = vmatpush.bf16.msra.mxu0 %v619
    %1054 = vmatpush.bf16.msra.mxu0 %v611
    %1055 = vmatpush.bf16.msra.mxu0 %v603
    %1056 = vmatmul.bf16.gmra.mxu0 %v64
    %v1057 = vpop.f32.mrf.mxu0
    %v1058 = vadd.f32 %v203, %v1057
    %v1059 = vpop.f32.mrf.mxu0
    %v1060 = vadd.f32 %v203, %v1059
    %1061 = vdwg.mxu0
    %1062 = vmatpush.bf16.msra.mxu0 %v723
    %1063 = vmatpush.bf16.msra.mxu0 %v715
    %1064 = vmatpush.bf16.msra.mxu0 %v707
    %1065 = vmatpush.bf16.msra.mxu0 %v699
    %1066 = vmatpush.bf16.msra.mxu0 %v691
    %1067 = vmatpush.bf16.msra.mxu0 %v683
    %1068 = vmatpush.bf16.msra.mxu0 %v675
    %1069 = vmatpush.bf16.msra.mxu0 %v667
    %1070 = vmatmul.bf16.gmra.mxu0 %v65
    %v1071 = vpop.f32.mrf.mxu0
    %v1072 = vadd.f32 %v1058, %v1071
    %v1073 = vpop.f32.mrf.mxu0
    %v1074 = vadd.f32 %v1060, %v1073
    %1075 = vdwg.mxu0
    %v1076 = vpack.c.bf16 %v904, %v876
    %v1077 = vpack.c.bf16 %v960, %v932
    %v1078 = vpack.c.bf16 %v1016, %v988
    %v1079 = vpack.c.bf16 %v1072, %v1044
    %v1080 = vpack.c.bf16 %v906, %v878
    %v1081 = vpack.c.bf16 %v962, %v934
    %v1082 = vpack.c.bf16 %v1018, %v990
    %v1083 = vpack.c.bf16 %v1074, %v1046
    %1084 = vst [vmem:[#allocation8] sm:$0xff] %v1076
    %1085 = vst [vmem:[#allocation8 + $0x8] sm:$0xff] %v1077
    %1086 = vst [vmem:[#allocation8 + $0x10] sm:$0xff] %v1078
    %1087 = vst [vmem:[#allocation8 + $0x18] sm:$0xff] %v1079
    %1088 = vst [vmem:[#allocation8 + $0x20] sm:$0xff] %v1080
    %1089 = vst [vmem:[#allocation8 + $0x28] sm:$0xff] %v1081
    %1090 = vst [vmem:[#allocation8 + $0x30] sm:$0xff] %v1082
    %1091 = vst [vmem:[#allocation8 + $0x38] sm:$0xff] %v1083
    // Predicated region
    $region26: #{_linear_apply_2d.1} parent=1 // pred_check
      _
    $region27: #{_linear_apply_2d.1} parent=1 // pred_check_branch
      %1093 = sbr.rel (0) target = $region29
    $region28: #{_linear_apply_2d.1} parent=1 // pred_region
      %1095 = vsyncadd [#allocation4], 0
      %s1096 = sshll.u32 [#allocation8], 4
      %s1097 = int_to_ptr.vmem [resolvable:$true] %s1096
      %s1098 = sshll.u32 %s3, 4
      %s1099 = int_to_ptr.hbm [resolvable:$true] %s1098
      %1104 = dma.vmem_to_hbm [thread:$0]  %s1097, 1024, %s1099, [#allocation4], 512, 512, 32
    $region29: #{_linear_apply_2d.1} parent=1 // pred_fallthru
      _
    // Predicated region
    $region30: #{_linear_apply_2d.1} parent=1 // pred_check
      _
    $region31: #{_linear_apply_2d.1} parent=1 // pred_check_branch
      %1106 = sbr.rel (0) target = $region33
    $region32: #{_linear_apply_2d.1} parent=1 // pred_region
      %1108 = dma.done [#allocation4], 1024
    $region33: #{_linear_apply_2d.1} parent=1 // pred_fallthru
      _
    %1109 = vsyncpa [#allocation3], 1
    %1110 = vsyncpa [#allocation6], 1
    %1111 = vsyncpa [#allocation4], 1

</llo_original>
